<compile_context>
chip_gen: v7x
topology: tpu7x:2x2x1
jax: 0.10.0
libtpu: 0.0.40
codegen_flags: <defaults>
</compile_context>

<pallas_src>
import functools

import jax
import jax.numpy as jnp
from jax.experimental import pallas as pl
from jax.experimental.pallas import tpu as pltpu

_LANE = 128  # TPU lane width


def _edge_decoder_kernel(z1t_ref, z2t_ref, w1at_ref, w1bt_ref, b1_ref,
                         w2t_ref, b2_ref, o_ref):
    # z1t/z2t: (H, TE)   w1at/w1bt: (H, H)   b1: (H, 1)
    # w2t:     (1, H)    b2: (1, 1)          o:  (1, TE)
    h = jnp.dot(w1at_ref[...], z1t_ref[...],
                preferred_element_type=jnp.float32)
    h = h + jnp.dot(w1bt_ref[...], z2t_ref[...],
                    preferred_element_type=jnp.float32)
    h = jax.nn.sigmoid(h + b1_ref[...])                      # (H, TE)
    out = jnp.dot(w2t_ref[...], h,
                  preferred_element_type=jnp.float32) + b2_ref[...]  # (1, TE)
    o_ref[...] = out.astype(o_ref.dtype)


@functools.partial(jax.jit, static_argnames=("edge_tile",))
def edge_decoder_forward(z_cell, z_drug, edge_label_index,
                         w1, b1, w2, b2, *, edge_tile=512):
    """Pallas implementation of EdgeDecoder.forward.

    z_cell: (N_cell, H) f32   z_drug: (N_drug, H) f32
    edge_label_index: (2, E) int32
    w1: (2H, H)  b1: (H,)  w2: (H, 1)  b2: (1,)     (w = PyTorch weight.T)
    returns: (E,) f32
    """
    H = z_cell.shape[-1]
    row1 = edge_label_index[0]
    row2 = edge_label_index[1]
    E = row1.shape[0]

    # ---- Tile / padding arithmetic (all static Python ints under jit). ----
    tile = max(_LANE, (edge_tile // _LANE) * _LANE)       # multiple of 128
    e_min = pl.cdiv(E, _LANE) * _LANE
    tile = min(tile, e_min)
    E_pad = pl.cdiv(E, tile) * tile
    # Prefer >=2 grid steps so v7x's two TensorCores both get work.
    if E_pad // tile < 2 and E_pad >= 2 * _LANE:
        tile = max(_LANE, (E_pad // 2 // _LANE) * _LANE)
        E_pad = pl.cdiv(E, tile) * tile
    pad = E_pad - E

    # ---- Gather glue (plain JAX); pad indices with 0 (valid row). ----------
    row1p = jnp.pad(row1, (0, pad))
    row2p = jnp.pad(row2, (0, pad))
    z1t = jnp.take(z_cell.T, row1p, axis=1)               # (H, E_pad)
    z2t = jnp.take(z_drug.T, row2p, axis=1)               # (H, E_pad)

    # ---- Parameter reshapes for the transposed pipeline. -------------------
    w1a_t = w1[:H, :].T                                    # (H, H)
    w1b_t = w1[H:, :].T                                    # (H, H)
    b1_col = b1.reshape(H, 1)                              # (H, 1)
    w2_row = w2.reshape(H, 1).T                            # (1, H)
    b2_2d = b2.reshape(1, 1)                               # (1, 1)

    grid = (E_pad // tile,)

    # VMEM budget: 2 activation inputs x 2 buffers x tile + output + weights.
    vmem_need = 4 * (2 * 2 * H * tile + 2 * tile + 2 * H * H + 2 * H + H + 1)
    vmem_limit = min(64 * 1024 * 1024,
                     max(32 * 1024 * 1024, 2 * vmem_need))

    cost = pl.CostEstimate(
        flops=2 * E_pad * (2 * H * H + H),
        transcendentals=E_pad * H,
        bytes_accessed=4 * (2 * E_pad * H + 2 * H * H + 2 * H + 1 + E_pad),
    )

    out = pl.pallas_call(
        _edge_decoder_kernel,
        out_shape=jax.ShapeDtypeStruct((1, E_pad), jnp.float32),
        grid_spec=pltpu.PrefetchScalarGridSpec(
            num_scalar_prefetch=0,
            grid=grid,
            in_specs=[
                pl.BlockSpec((H, tile), lambda i: (0, i)),   # z1.T tile
                pl.BlockSpec((H, tile), lambda i: (0, i)),   # z2.T tile
                pl.BlockSpec((H, H), lambda i: (0, 0)),      # w1[:H].T (full)
                pl.BlockSpec((H, H), lambda i: (0, 0)),      # w1[H:].T (full)
                pl.BlockSpec((H, 1), lambda i: (0, 0)),      # b1 column
                pl.BlockSpec((1, H), lambda i: (0, 0)),      # w2.T row
                pl.BlockSpec((1, 1), lambda i: (0, 0)),      # b2
            ],
            out_specs=pl.BlockSpec((1, tile), lambda i: (0, i)),  # lane-dense
        ),
        compiler_params=pltpu.CompilerParams(
            dimension_semantics=("parallel",),
            vmem_limit_bytes=vmem_limit),
        cost_estimate=cost,
    )(z1t, z2t, w1a_t, w1b_t, b1_col, w2_row, b2_2d)

    return out.reshape(-1)[:E]                              # (E,)


def reference_forward(z_cell, z_drug, edge_label_index, w1, b1, w2, b2):
    row1 = edge_label_index[0]
    row2 = edge_label_index[1]
    z = jnp.concatenate([z_cell[row1], z_drug[row2]], axis=-1)
    z = jax.nn.sigmoid(z @ w1 + b1)
    z = z @ w2 + b2
    return z.reshape(-1)


if __name__ == "__main__":
    key = jax.random.PRNGKey(0)
    H = 32            # hidden_channels
    N_CELL = 6
    N_DRUG = 5
    E = 50            # deliberately NOT a multiple of the tile -> exercises padding

    k1, k2, k3, k4, k5, k6, k7, k8 = jax.random.split(key, 8)

    # Node embeddings (z_dict['cellline'], z_dict['drug'])
    z_cell = jax.random.normal(k1, (N_CELL, H), dtype=jnp.float32)
    z_drug = jax.random.normal(k2, (N_DRUG, H), dtype=jnp.float32)

    # edge_label_index: (2, E) int32
    row1 = jax.random.randint(k3, (E,), 0, N_CELL, dtype=jnp.int32)
    row2 = jax.random.randint(k4, (E,), 0, N_DRUG, dtype=jnp.int32)
    edge_label_index = jnp.stack([row1, row2], axis=0)

    # lin1: Linear(2H, H) -> stored as (2H, H) (= PyTorch weight.T), bias (H,)
    # lin2: Linear(H, 1)  -> stored as (H, 1),  bias (1,)
    w1 = jax.random.normal(k5, (2 * H, H), dtype=jnp.float32) * 0.1
    b1 = jax.random.normal(k6, (H,), dtype=jnp.float32) * 0.1
    w2 = jax.random.normal(k7, (H, 1), dtype=jnp.float32) * 0.1
    b2 = jax.random.normal(k8, (1,), dtype=jnp.float32) * 0.1

    out = edge_decoder_forward(z_cell, z_drug, edge_label_index,
                               w1, b1, w2, b2, edge_tile=512)
    out = jax.block_until_ready(out)

    ref = reference_forward(z_cell, z_drug, edge_label_index, w1, b1, w2, b2)
    assert out.shape == (E,), out.shape
    assert jnp.allclose(out, ref, atol=1e-5, rtol=1e-5), (out, ref)

    print("KERNEL_OK")
</pallas_src>

<mosaic_0001>
module attributes {stable_mosaic.version = 11 : i64} {
  func.func @_edge_decoder_kernel(%arg0: i32, %arg1: memref<32x128xf32, #tpu.memory_space<vmem>>, %arg2: memref<32x128xf32, #tpu.memory_space<vmem>>, %arg3: memref<32x32xf32, #tpu.memory_space<vmem>>, %arg4: memref<32x32xf32, #tpu.memory_space<vmem>>, %arg5: memref<32x1xf32, #tpu.memory_space<vmem>>, %arg6: memref<1x32xf32, #tpu.memory_space<vmem>>, %arg7: memref<1x1xf32, #tpu.memory_space<vmem>>, %arg8: memref<1x128xf32, #tpu.memory_space<vmem>>) attributes {dimension_semantics = [#tpu.dimension_semantics<parallel>], iteration_bounds = array<i64: 1>, scalar_prefetch = 0 : i64, scratch_operands = 0 : i64, tpu.core_type = #tpu.core_type<tc>, window_params = [{transform_indices = @transform_0, window_bounds = array<i64: 32, 128>}, {transform_indices = @transform_1, window_bounds = array<i64: 32, 128>}, {pipeline_mode = #tpu.pipeline_mode<synchronous>, transform_indices = @transform_2, window_bounds = array<i64: 32, 32>}, {pipeline_mode = #tpu.pipeline_mode<synchronous>, transform_indices = @transform_3, window_bounds = array<i64: 32, 32>}, {pipeline_mode = #tpu.pipeline_mode<synchronous>, transform_indices = @transform_4, window_bounds = array<i64: 32, 1>}, {pipeline_mode = #tpu.pipeline_mode<synchronous>, transform_indices = @transform_5, window_bounds = array<i64: 1, 32>}, {pipeline_mode = #tpu.pipeline_mode<synchronous>, transform_indices = @transform_6, window_bounds = array<i64: 1, 1>}, {transform_indices = @transform_7, window_bounds = array<i64: 1, 128>}]} {
    %c0 = arith.constant 0 : index
    %c0_0 = arith.constant 0 : index
    %0 = vector.load %arg3[%c0, %c0_0] : memref<32x32xf32, #tpu.memory_space<vmem>>, vector<32x32xf32>
    %c0_1 = arith.constant 0 : index
    %c0_2 = arith.constant 0 : index
    %1 = vector.load %arg1[%c0_1, %c0_2] : memref<32x128xf32, #tpu.memory_space<vmem>>, vector<32x128xf32>
    %cst = arith.constant dense<0.000000e+00> : vector<32x128xf32>
    %2 = tpu.matmul %0, %1, %cst {dimension_numbers = #tpu.dot_dimension_numbers<[1], [0], [0], [1], [0, 0, 1, 1], [], []>} : vector<32x32xf32>, vector<32x128xf32>, vector<32x128xf32> -> vector<32x128xf32>
    %c0_3 = arith.constant 0 : index
    %c0_4 = arith.constant 0 : index
    %3 = vector.load %arg4[%c0_3, %c0_4] : memref<32x32xf32, #tpu.memory_space<vmem>>, vector<32x32xf32>
    %c0_5 = arith.constant 0 : index
    %c0_6 = arith.constant 0 : index
    %4 = vector.load %arg2[%c0_5, %c0_6] : memref<32x128xf32, #tpu.memory_space<vmem>>, vector<32x128xf32>
    %cst_7 = arith.constant dense<0.000000e+00> : vector<32x128xf32>
    %5 = tpu.matmul %3, %4, %cst_7 {dimension_numbers = #tpu.dot_dimension_numbers<[1], [0], [0], [1], [0, 0, 1, 1], [], []>} : vector<32x32xf32>, vector<32x128xf32>, vector<32x128xf32> -> vector<32x128xf32>
    %6 = arith.addf %2, %5 : vector<32x128xf32>
    %c0_8 = arith.constant 0 : index
    %c0_9 = arith.constant 0 : index
    %7 = vector.load %arg5[%c0_8, %c0_9] : memref<32x1xf32, #tpu.memory_space<vmem>>, vector<32x1xf32>
    %8 = vector.broadcast %7 : vector<32x1xf32> to vector<32x128xf32>
    %9 = arith.addf %6, %8 : vector<32x128xf32>
    %10 = arith.negf %9 : vector<32x128xf32>
    %11 = math.exp %10 : vector<32x128xf32>
    %cst_10 = arith.constant 1.000000e+00 : f32
    %12 = vector.broadcast %cst_10 : f32 to vector<32x128xf32>
    %13 = arith.addf %12, %11 : vector<32x128xf32>
    %14 = arith.divf %12, %13 : vector<32x128xf32>
    %c0_11 = arith.constant 0 : index
    %c0_12 = arith.constant 0 : index
    %15 = vector.load %arg6[%c0_11, %c0_12] : memref<1x32xf32, #tpu.memory_space<vmem>>, vector<1x32xf32>
    %cst_13 = arith.constant dense<0.000000e+00> : vector<1x128xf32>
    %16 = tpu.matmul %15, %14, %cst_13 {dimension_numbers = #tpu.dot_dimension_numbers<[1], [0], [0], [1], [0, 0, 1, 1], [], []>} : vector<1x32xf32>, vector<32x128xf32>, vector<1x128xf32> -> vector<1x128xf32>
    %c0_14 = arith.constant 0 : index
    %c0_15 = arith.constant 0 : index
    %17 = vector.load %arg7[%c0_14, %c0_15] : memref<1x1xf32, #tpu.memory_space<vmem>>, vector<1x1xf32>
    %18 = vector.broadcast %17 : vector<1x1xf32> to vector<1x128xf32>
    %19 = arith.addf %16, %18 : vector<1x128xf32>
    %c0_16 = arith.constant 0 : index
    %c0_17 = arith.constant 0 : index
    %20 = vector.load %arg8[%c0_16, %c0_17] : memref<1x128xf32, #tpu.memory_space<vmem>>, vector<1x128xf32>
    tpu.vector_store %arg8[%c0_16, %c0_17], %19 {strides = array<i32>} : memref<1x128xf32, #tpu.memory_space<vmem>>, vector<1x128xf32>,
    return
  }
  func.func @transform_0(%arg0: i32) -> (i32, i32) {
    %c0_i32 = arith.constant 0 : i32
    %c0_i32_0 = arith.constant 0 : i32
    return %c0_i32, %arg0 : i32, i32
  }
  func.func @transform_1(%arg0: i32) -> (i32, i32) {
    %c0_i32 = arith.constant 0 : i32
    %c0_i32_0 = arith.constant 0 : i32
    return %c0_i32, %arg0 : i32, i32
  }
  func.func @transform_2(%arg0: i32) -> (i32, i32) {
    %c0_i32 = arith.constant 0 : i32
    %c0_i32_0 = arith.constant 0 : i32
    %c0_i32_1 = arith.constant 0 : i32
    return %c0_i32, %c0_i32_0 : i32, i32
  }
  func.func @transform_3(%arg0: i32) -> (i32, i32) {
    %c0_i32 = arith.constant 0 : i32
    %c0_i32_0 = arith.constant 0 : i32
    %c0_i32_1 = arith.constant 0 : i32
    return %c0_i32, %c0_i32_0 : i32, i32
  }
  func.func @transform_4(%arg0: i32) -> (i32, i32) {
    %c0_i32 = arith.constant 0 : i32
    %c0_i32_0 = arith.constant 0 : i32
    %c0_i32_1 = arith.constant 0 : i32
    return %c0_i32, %c0_i32_0 : i32, i32
  }
  func.func @transform_5(%arg0: i32) -> (i32, i32) {
    %c0_i32 = arith.constant 0 : i32
    %c0_i32_0 = arith.constant 0 : i32
    %c0_i32_1 = arith.constant 0 : i32
    return %c0_i32, %c0_i32_0 : i32, i32
  }
  func.func @transform_6(%arg0: i32) -> (i32, i32) {
    %c0_i32 = arith.constant 0 : i32
    %c0_i32_0 = arith.constant 0 : i32
    %c0_i32_1 = arith.constant 0 : i32
    return %c0_i32, %c0_i32_0 : i32, i32
  }
  func.func @transform_7(%arg0: i32) -> (i32, i32) {
    %c0_i32 = arith.constant 0 : i32
    %c0_i32_0 = arith.constant 0 : i32
    return %c0_i32, %arg0 : i32, i32
  }
}

</mosaic_0001>

<llo_original>
// kernel: edge_decoder_forward.1
$region0: #{edge_decoder_forward.1}
  #allocation0 [shape = 'u32[]', space=smem, size = 0x4, offset = 0x4, fixed_abs, tag = 'smem constant byte address 0x4 - core index']
  #allocation1 [shape = 'u32[144,128]{1,0:T(1,128)}', space=vmem, size = 0x12000, scoped, tag = 'internal scratch']
  #allocation2 [shape = 'f32[1,1]{1,0:T(1,128)S(1)}', space=vmem, size = 0x200, scoped, tag = 'scoped memory for edge_decoder_forward.1']
  %s0 = inlined_call_operand.vmem [shape: f32[32,128], index: 0, kind: input, shape index: {}]
  %s1 = inlined_call_operand.vmem [shape: f32[32,128], index: 1, kind: input, shape index: {}]
  %s2 = inlined_call_operand.vmem [shape: f32[32,32], index: 2, kind: input, shape index: {}]
  %s3 = inlined_call_operand.vmem [shape: f32[32,32], index: 3, kind: input, shape index: {}]
  %s4 = inlined_call_operand.vmem [shape: f32[32,1], index: 4, kind: input, shape index: {}]
  %s5 = inlined_call_operand.vmem [shape: f32[1,32], index: 5, kind: input, shape index: {}]
  %s6 = inlined_call_operand.<no memory space> [shape: f32[1,1], index: 6, kind: input, shape index: {}]
  %s7 = inlined_call_operand.vmem [shape: f32[1,128], index: 7, kind: output, shape index: {}]
  %s8 = sld [smem:[#allocation0]]
  $region38: #{edge_decoder_forward.1} parent=0
    _
  %s10 = ssub.s32 1, %s8
  %s11 = scalar_select 0, %s10, %s8
  %v12 = vstv %s6
  %13 = vst [vmem:[#allocation2] sm:$0x1] %v12
  // Predicated region
  $region2: #{edge_decoder_forward.1} parent=0 // pred_check
    _
  $region3: #{edge_decoder_forward.1} parent=0 // pred_check_branch
    %15 = sbr.rel (0) target = $region5
  $region4: #{edge_decoder_forward.1} parent=0 // pred_region
    _
  $region5: #{edge_decoder_forward.1} parent=0 // pred_fallthru
    _
  // Predicated region
  $region6: #{edge_decoder_forward.1} parent=0 // pred_check
    _
  $region7: #{edge_decoder_forward.1} parent=0 // pred_check_branch
    %17 = sbr.rel (0) target = $region9
  $region8: #{edge_decoder_forward.1} parent=0 // pred_region
    _
  $region9: #{edge_decoder_forward.1} parent=0 // pred_fallthru
    _
  // Predicated region
  $region10: #{edge_decoder_forward.1} parent=0 // pred_check
    _
  $region11: #{edge_decoder_forward.1} parent=0 // pred_check_branch
    %19 = sbr.rel (0) target = $region13
  $region12: #{edge_decoder_forward.1} parent=0 // pred_region
    _
  $region13: #{edge_decoder_forward.1} parent=0 // pred_fallthru
    _
  // Predicated region
  $region14: #{edge_decoder_forward.1} parent=0 // pred_check
    _
  $region15: #{edge_decoder_forward.1} parent=0 // pred_check_branch
    %21 = sbr.rel (0) target = $region17
  $region16: #{edge_decoder_forward.1} parent=0 // pred_region
    _
  $region17: #{edge_decoder_forward.1} parent=0 // pred_fallthru
    _
  // Predicated region
  $region18: #{edge_decoder_forward.1} parent=0 // pred_check
    _
  $region19: #{edge_decoder_forward.1} parent=0 // pred_check_branch
    %23 = sbr.rel (0) target = $region21
  $region20: #{edge_decoder_forward.1} parent=0 // pred_region
    _
  $region21: #{edge_decoder_forward.1} parent=0 // pred_fallthru
    _
  // Predicated region
  $region22: #{edge_decoder_forward.1} parent=0 // pred_check
    _
  $region23: #{edge_decoder_forward.1} parent=0 // pred_check_branch
    %25 = sbr.rel (0) target = $region25
  $region24: #{edge_decoder_forward.1} parent=0 // pred_region
    _
  $region25: #{edge_decoder_forward.1} parent=0 // pred_fallthru
    _
  // Predicated region
  $region26: #{edge_decoder_forward.1} parent=0 // pred_check
    _
  $region27: #{edge_decoder_forward.1} parent=0 // pred_check_branch
    %27 = sbr.rel (0) target = $region29
  $region28: #{edge_decoder_forward.1} parent=0 // pred_region
    _
  $region29: #{edge_decoder_forward.1} parent=0 // pred_fallthru
    _
  %v28 = vld [vmem:[%s2] sm:$0xff]
  %v29 = vld [vmem:[%s2 + $0x8] sm:$0xff]
  %v30 = vld [vmem:[%s2 + $0x10] sm:$0xff]
  %v31 = vld [vmem:[%s2 + $0x18] sm:$0xff]
  %v32 = vld [vmem:[%s0] sm:$0xff]
  %v33 = vld [vmem:[%s0 + $0x8] sm:$0xff]
  %v34 = vld [vmem:[%s0 + $0x10] sm:$0xff]
  %v35 = vld [vmem:[%s0 + $0x18] sm:$0xff]
  %v36 = vld [vmem:[%s3] sm:$0xff]
  %v37 = vld [vmem:[%s3 + $0x8] sm:$0xff]
  %v38 = vld [vmem:[%s3 + $0x10] sm:$0xff]
  %v39 = vld [vmem:[%s3 + $0x18] sm:$0xff]
  %v40 = vld [vmem:[%s1] sm:$0xff]
  %v41 = vld [vmem:[%s1 + $0x8] sm:$0xff]
  %v42 = vld [vmem:[%s1 + $0x10] sm:$0xff]
  %v43 = vld [vmem:[%s1 + $0x18] sm:$0xff]
  %vm44 = vcmask 261120
  %v46 = vsel %vm44, %v36, 0
  %v49 = vsel %vm44, %v37, 0
  %v52 = vsel %vm44, %v38, 0
  %v55 = vsel %vm44, %v39, 0
  %57 = vmatprep.subr.mxu0 0.0
  %58 = vmatpush1.msra.mxu0 %v40
  %59 = vmatprep.subr.mxu0 0.0
  %60 = vmatpush1.msra.mxu0 %v41
  %61 = vmatprep.subr.mxu0 0.0
  %62 = vmatpush1.msra.mxu0 %v42
  %63 = vmatprep.subr.mxu0 0.0
  %64 = vmatpush1.msra.mxu0 %v43
  %65 = vmatprep.subr.mxu0 0.0
  %66 = vmatpush1.msra.mxu0 0.0
  %67 = vmatprep.subr.mxu0 0.0
  %68 = vmatpush1.msra.mxu0 0.0
  %69 = vmatprep.subr.mxu0 0.0
  %70 = vmatpush1.msra.mxu0 0.0
  %71 = vmatprep.subr.mxu0 0.0
  %72 = vmatpush1.msra.mxu0 0.0
  %73 = vmatprep.subr.mxu0 0.0
  %74 = vmatpush1.msra.mxu0 0.0
  %75 = vmatprep.subr.mxu0 0.0
  %76 = vmatpush1.msra.mxu0 0.0
  %77 = vmatprep.subr.mxu0 0.0
  %78 = vmatpush1.msra.mxu0 0.0
  %79 = vmatprep.subr.mxu0 0.0
  %80 = vmatpush1.msra.mxu0 0.0
  %81 = vmatprep.subr.mxu0 0.0
  %82 = vmatpush1.msra.mxu0 0.0
  %83 = vmatprep.subr.mxu0 0.0
  %84 = vmatpush1.msra.mxu0 0.0
  %85 = vmatprep.subr.mxu0 0.0
  %86 = vmatpush1.msra.mxu0 0.0
  %87 = vmatprep.subr.mxu0 0.0
  %88 = vmatpush1.msra.mxu0 0.0
  %89 = vmatprep.subr.mxu0 0.0
  %90 = vmatpush1.msra.mxu0 0.0
  %91 = vmatprep.subr.mxu0 0.0
  %92 = vmatpush1.msra.mxu0 0.0
  %93 = vmatprep.subr.mxu0 0.0
  %94 = vmatpush1.msra.mxu0 0.0
  %95 = vmatprep.subr.mxu0 0.0
  %96 = vmatpush1.msra.mxu0 0.0
  %97 = vmatprep.subr.mxu0 0.0
  %98 = vmatpush1.msra.mxu0 0.0
  %99 = vmatprep.subr.mxu0 0.0
  %100 = vmatpush1.msra.mxu0 0.0
  %101 = vmatprep.subr.mxu0 0.0
  %102 = vmatpush1.msra.mxu0 0.0
  %103 = vmatprep.subr.mxu0 0.0
  %104 = vmatpush1.msra.mxu0 0.0
  %105 = vmatprep.subr.mxu0 0.0
  %106 = vmatpush1.msra.mxu0 0.0
  %107 = vmatprep.subr.mxu0 0.0
  %108 = vmatpush1.msra.mxu0 0.0
  %109 = vmatprep.subr.mxu0 0.0
  %110 = vmatpush1.msra.mxu0 0.0
  %111 = vmatprep.subr.mxu0 0.0
  %112 = vmatpush1.msra.mxu0 0.0
  %113 = vmatprep.subr.mxu0 0.0
  %114 = vmatpush1.msra.mxu0 0.0
  %115 = vmatprep.subr.mxu0 0.0
  %116 = vmatpush1.msra.mxu0 0.0
  %117 = vmatprep.subr.mxu0 0.0
  %118 = vmatpush1.msra.mxu0 0.0
  %119 = vmatprep.subr.mxu0 0.0
  %120 = vmatpush1.msra.mxu0 0.0
  %121 = vmatprep.mubr.f32.mxu0 0.0
  %122 = vmatmul.mubr.f32.gmra.mrb[0].mxu0 %v46
  %v123 = vpop.f32.mrb[0].mxu0
  %v124 = vadd.f32 0.0, %v123
  %v125 = vpop.f32.mrb[0].mxu0
  %126 = vmatprep.mubr.f32.mxu0 0.0
  %127 = vmatmul.mubr.f32.gmra.mrb[0].mxu0 %v49
  %v128 = vpop.f32.mrb[0].mxu0
  %v129 = vadd.f32 0.0, %v128
  %v130 = vpop.f32.mrb[0].mxu0
  %131 = vmatprep.mubr.f32.mxu0 0.0
  %132 = vmatmul.mubr.f32.gmra.mrb[0].mxu0 %v52
  %v133 = vpop.f32.mrb[0].mxu0
  %v134 = vadd.f32 0.0, %v133
  %v135 = vpop.f32.mrb[0].mxu0
  %136 = vmatprep.mubr.f32.mxu0 0.0
  %137 = vmatmul.mubr.f32.gmra.mrb[0].mxu0 %v55
  %v138 = vpop.f32.mrb[0].mxu0
  %v139 = vadd.f32 0.0, %v138
  %v140 = vpop.f32.mrb[0].mxu0
  %141 = vdwg.mxu0
  %v143 = vsel %vm44, %v28, 0
  %v146 = vsel %vm44, %v29, 0
  %v149 = vsel %vm44, %v30, 0
  %v152 = vsel %vm44, %v31, 0
  %154 = vmatprep.subr.mxu0 0.0
  %155 = vmatpush1.msra.mxu0 %v32
  %156 = vmatprep.subr.mxu0 0.0
  %157 = vmatpush1.msra.mxu0 %v33
  %158 = vmatprep.subr.mxu0 0.0
  %159 = vmatpush1.msra.mxu0 %v34
  %160 = vmatprep.subr.mxu0 0.0
  %161 = vmatpush1.msra.mxu0 %v35
  %162 = vmatprep.subr.mxu0 0.0
  %163 = vmatpush1.msra.mxu0 0.0
  %164 = vmatprep.subr.mxu0 0.0
  %165 = vmatpush1.msra.mxu0 0.0
  %166 = vmatprep.subr.mxu0 0.0
  %167 = vmatpush1.msra.mxu0 0.0
  %168 = vmatprep.subr.mxu0 0.0
  %169 = vmatpush1.msra.mxu0 0.0
  %170 = vmatprep.subr.mxu0 0.0
  %171 = vmatpush1.msra.mxu0 0.0
  %172 = vmatprep.subr.mxu0 0.0
  %173 = vmatpush1.msra.mxu0 0.0
  %174 = vmatprep.subr.mxu0 0.0
  %175 = vmatpush1.msra.mxu0 0.0
  %176 = vmatprep.subr.mxu0 0.0
  %177 = vmatpush1.msra.mxu0 0.0
  %178 = vmatprep.subr.mxu0 0.0
  %179 = vmatpush1.msra.mxu0 0.0
  %180 = vmatprep.subr.mxu0 0.0
  %181 = vmatpush1.msra.mxu0 0.0
  %182 = vmatprep.subr.mxu0 0.0
  %183 = vmatpush1.msra.mxu0 0.0
  %184 = vmatprep.subr.mxu0 0.0
  %185 = vmatpush1.msra.mxu0 0.0
  %186 = vmatprep.subr.mxu0 0.0
  %187 = vmatpush1.msra.mxu0 0.0
  %188 = vmatprep.subr.mxu0 0.0
  %189 = vmatpush1.msra.mxu0 0.0
  %190 = vmatprep.subr.mxu0 0.0
  %191 = vmatpush1.msra.mxu0 0.0
  %192 = vmatprep.subr.mxu0 0.0
  %193 = vmatpush1.msra.mxu0 0.0
  %194 = vmatprep.subr.mxu0 0.0
  %195 = vmatpush1.msra.mxu0 0.0
  %196 = vmatprep.subr.mxu0 0.0
  %197 = vmatpush1.msra.mxu0 0.0
  %198 = vmatprep.subr.mxu0 0.0
  %199 = vmatpush1.msra.mxu0 0.0
  %200 = vmatprep.subr.mxu0 0.0
  %201 = vmatpush1.msra.mxu0 0.0
  %202 = vmatprep.subr.mxu0 0.0
  %203 = vmatpush1.msra.mxu0 0.0
  %204 = vmatprep.subr.mxu0 0.0
  %205 = vmatpush1.msra.mxu0 0.0
  %206 = vmatprep.subr.mxu0 0.0
  %207 = vmatpush1.msra.mxu0 0.0
  %208 = vmatprep.subr.mxu0 0.0
  %209 = vmatpush1.msra.mxu0 0.0
  %210 = vmatprep.subr.mxu0 0.0
  %211 = vmatpush1.msra.mxu0 0.0
  %212 = vmatprep.subr.mxu0 0.0
  %213 = vmatpush1.msra.mxu0 0.0
  %214 = vmatprep.subr.mxu0 0.0
  %215 = vmatpush1.msra.mxu0 0.0
  %216 = vmatprep.subr.mxu0 0.0
  %217 = vmatpush1.msra.mxu0 0.0
  %218 = vmatprep.mubr.f32.mxu0 0.0
  %219 = vmatmul.mubr.f32.gmra.mrb[0].mxu0 %v143
  %v220 = vpop.f32.mrb[0].mxu0
  %v221 = vadd.f32 %v124, %v220
  %v222 = vpop.f32.mrb[0].mxu0
  %223 = vmatprep.mubr.f32.mxu0 0.0
  %224 = vmatmul.mubr.f32.gmra.mrb[0].mxu0 %v146
  %v225 = vpop.f32.mrb[0].mxu0
  %v226 = vadd.f32 %v129, %v225
  %v227 = vpop.f32.mrb[0].mxu0
  %228 = vmatprep.mubr.f32.mxu0 0.0
  %229 = vmatmul.mubr.f32.gmra.mrb[0].mxu0 %v149
  %v230 = vpop.f32.mrb[0].mxu0
  %v231 = vadd.f32 %v134, %v230
  %v232 = vpop.f32.mrb[0].mxu0
  %233 = vmatprep.mubr.f32.mxu0 0.0
  %234 = vmatmul.mubr.f32.gmra.mrb[0].mxu0 %v152
  %v235 = vpop.f32.mrb[0].mxu0
  %v236 = vadd.f32 %v139, %v235
  %v237 = vpop.f32.mrb[0].mxu0
  %238 = vdwg.mxu0
  %v239 = vld [vmem:[%s4] sm:$0xff]
  %v240 = vld [vmem:[%s4 + $0x8] sm:$0xff]
  %v241 = vld [vmem:[%s4 + $0x10] sm:$0xff]
  %v242 = vld [vmem:[%s4 + $0x18] sm:$0xff]
  %244 = vset.pattern.permute.xlu0 0
  %245 = vperm.xlu0 %244, %v239
  %v246 = vpop.permute.xlu0 %245
  %249 = vset.pattern.permute.xlu0 0
  %250 = vperm.xlu0 %249, %v240
  %v251 = vpop.permute.xlu0 %250
  %254 = vset.pattern.permute.xlu0 0
  %255 = vperm.xlu0 %254, %v241
  %v256 = vpop.permute.xlu0 %255
  %259 = vset.pattern.permute.xlu0 0
  %260 = vperm.xlu0 %259, %v242
  %v261 = vpop.permute.xlu0 %260
  %v263 = vadd.f32 %v221, %v246
  %v264 = vadd.f32 %v226, %v251
  %v265 = vadd.f32 %v231, %v256
  %v266 = vadd.f32 %v236, %v261
  %v267 = vxor.u32 %v263, 2147483648
  %v268 = vxor.u32 %v264, 2147483648
  %v269 = vxor.u32 %v265, 2147483648
  %v270 = vxor.u32 %v266, 2147483648
  %v271 = vmul.f32 %v267, 1.442695
  %v272 = vpow.pop %v271
  %v273 = vmul.f32 %v268, 1.442695
  %v274 = vpow.pop %v273
  %v275 = vmul.f32 %v269, 1.442695
  %v276 = vpow.pop %v275
  %v277 = vmul.f32 %v270, 1.442695
  %v278 = vpow.pop %v277
  %v279 = vadd.f32 %v272, 1.0
  %v280 = vadd.f32 %v274, 1.0
  %v281 = vadd.f32 %v276, 1.0
  %v282 = vadd.f32 %v278, 1.0
  %v283 = vrcp.pop %v279
  %v284 = vmul.f32 1.0, %v283
  %v285 = vrcp.pop %v280
  %v286 = vmul.f32 1.0, %v285
  %v287 = vrcp.pop %v281
  %v288 = vmul.f32 1.0, %v287
  %v289 = vrcp.pop %v282
  %v290 = vmul.f32 1.0, %v289
  %v291 = vld [vmem:[%s5] sm:$0x1]
  %v292 = vld [vmem:[#allocation2] sm:$0x1]
  %294 = vset.pattern.permute.xlu0 0
  %295 = vperm.xlu0 %294, %v292
  %v296 = vpop.permute.xlu0 %295
  %v298 = vlaneseq
  %v299 = vshrl.u32 %v298, 7
  %v300 = vsub.s32 0, %v299
  %v301 = vrot.slane %v296, %v300
  %v303 = vsel %vm44, %v291, 0
  %305 = vmatprep.subr.mxu0 0.0
  %306 = vmatpush1.msra.mxu0 %v284
  %307 = vmatprep.subr.mxu0 0.0
  %308 = vmatpush1.msra.mxu0 %v286
  %309 = vmatprep.subr.mxu0 0.0
  %310 = vmatpush1.msra.mxu0 %v288
  %311 = vmatprep.subr.mxu0 0.0
  %312 = vmatpush1.msra.mxu0 %v290
  %313 = vmatprep.subr.mxu0 0.0
  %314 = vmatpush1.msra.mxu0 0.0
  %315 = vmatprep.subr.mxu0 0.0
  %316 = vmatpush1.msra.mxu0 0.0
  %317 = vmatprep.subr.mxu0 0.0
  %318 = vmatpush1.msra.mxu0 0.0
  %319 = vmatprep.subr.mxu0 0.0
  %320 = vmatpush1.msra.mxu0 0.0
  %321 = vmatprep.subr.mxu0 0.0
  %322 = vmatpush1.msra.mxu0 0.0
  %323 = vmatprep.subr.mxu0 0.0
  %324 = vmatpush1.msra.mxu0 0.0
  %325 = vmatprep.subr.mxu0 0.0
  %326 = vmatpush1.msra.mxu0 0.0
  %327 = vmatprep.subr.mxu0 0.0
  %328 = vmatpush1.msra.mxu0 0.0
  %329 = vmatprep.subr.mxu0 0.0
  %330 = vmatpush1.msra.mxu0 0.0
  %331 = vmatprep.subr.mxu0 0.0
  %332 = vmatpush1.msra.mxu0 0.0
  %333 = vmatprep.subr.mxu0 0.0
  %334 = vmatpush1.msra.mxu0 0.0
  %335 = vmatprep.subr.mxu0 0.0
  %336 = vmatpush1.msra.mxu0 0.0
  %337 = vmatprep.subr.mxu0 0.0
  %338 = vmatpush1.msra.mxu0 0.0
  %339 = vmatprep.subr.mxu0 0.0
  %340 = vmatpush1.msra.mxu0 0.0
  %341 = vmatprep.subr.mxu0 0.0
  %342 = vmatpush1.msra.mxu0 0.0
  %343 = vmatprep.subr.mxu0 0.0
  %344 = vmatpush1.msra.mxu0 0.0
  %345 = vmatprep.subr.mxu0 0.0
  %346 = vmatpush1.msra.mxu0 0.0
  %347 = vmatprep.subr.mxu0 0.0
  %348 = vmatpush1.msra.mxu0 0.0
  %349 = vmatprep.subr.mxu0 0.0
  %350 = vmatpush1.msra.mxu0 0.0
  %351 = vmatprep.subr.mxu0 0.0
  %352 = vmatpush1.msra.mxu0 0.0
  %353 = vmatprep.subr.mxu0 0.0
  %354 = vmatpush1.msra.mxu0 0.0
  %355 = vmatprep.subr.mxu0 0.0
  %356 = vmatpush1.msra.mxu0 0.0
  %357 = vmatprep.subr.mxu0 0.0
  %358 = vmatpush1.msra.mxu0 0.0
  %359 = vmatprep.subr.mxu0 0.0
  %360 = vmatpush1.msra.mxu0 0.0
  %361 = vmatprep.subr.mxu0 0.0
  %362 = vmatpush1.msra.mxu0 0.0
  %363 = vmatprep.subr.mxu0 0.0
  %364 = vmatpush1.msra.mxu0 0.0
  %365 = vmatprep.subr.mxu0 0.0
  %366 = vmatpush1.msra.mxu0 0.0
  %367 = vmatprep.subr.mxu0 0.0
  %368 = vmatpush1.msra.mxu0 0.0
  %369 = vmatprep.mubr.f32.mxu0 0.0
  %370 = vmatmul.mubr.f32.gmra.mrb[0].mxu0 %v303
  %v371 = vpop.f32.mrb[0].mxu0
  %v372 = vadd.f32 %v301, %v371
  %v373 = vpop.f32.mrb[0].mxu0
  %374 = vdwg.mxu0
  %375 = vst [vmem:[%s7] sm:$0x1] %v372
  // Predicated region
  $region30: #{edge_decoder_forward.1} parent=0 // pred_check
    _
  $region31: #{edge_decoder_forward.1} parent=0 // pred_check_branch
    %377 = sbr.rel (0) target = $region33
  $region32: #{edge_decoder_forward.1} parent=0 // pred_region
    _
  $region33: #{edge_decoder_forward.1} parent=0 // pred_fallthru
    _
  // Predicated region
  $region34: #{edge_decoder_forward.1} parent=0 // pred_check
    _
  $region35: #{edge_decoder_forward.1} parent=0 // pred_check_branch
    %379 = sbr.rel (0) target = $region37
  $region36: #{edge_decoder_forward.1} parent=0 // pred_region
    _
  $region37: #{edge_decoder_forward.1} parent=0 // pred_fallthru
    _

</llo_original>
